<compile_context>
chip_gen: v7x
topology: tpu7x:2x2x1
jax: 0.10.0
libtpu: 0.0.40
codegen_flags: <defaults>
</compile_context>

<pallas_src>
import functools

import jax
import jax.numpy as jnp
from jax.experimental import pallas as pl
from jax.experimental.pallas import tpu as pltpu


def _mask_l2_kernel(p_ref, g_ref, m_ref, out_ref, *, th, true_h, padded):
    """Grid = (batch, row_chunk); both axes parallel.

    p_ref   : (TH, W) block of pred[:, 0]  (channel 0 only, via BlockSpec)
    g_ref   : (TH, W) block of gt
    m_ref   : (TH, W) block of mask
    out_ref : (8, 128) per-(batch, chunk) partials;
              sublanes 0-3 = sum((p-g)^2 * m), sublanes 4-7 = sum(m).
    """
    p = p_ref[...].astype(jnp.float32)
    g = g_ref[...].astype(jnp.float32)
    m = m_ref[...].astype(jnp.float32)
    d = p - g
    sq = d * d * m

    if padded:
        # Last chunk may extend past H; zero contributions from invalid rows
        # (the padded region of the input block holds unspecified data).
        c = pl.program_id(1)
        row = jax.lax.broadcasted_iota(jnp.int32, p.shape, 0) + c * th
        valid = row < true_h
        sq = jnp.where(valid, sq, 0.0)
        m = jnp.where(valid, m, 0.0)

    sq_sum = jnp.sum(sq)
    m_sum = jnp.sum(m)

    sel = jax.lax.broadcasted_iota(jnp.int32, out_ref.shape, 0)
    out_ref[...] = jnp.where(sel < 4, sq_sum, m_sum)


def _row_multiple(*dtypes):
    """Sublane-packing-aware row granularity (f32->8, bf16->16, int8->32)."""
    mult = 8
    for dt in dtypes:
        isz = jnp.dtype(dt).itemsize
        if isz < 4:
            mult = max(mult, 32 // isz)
    return mult


def _pick_row_chunk(H, W, row_multiple, itemsize, target_bytes):
    """Rows per chunk: multiple of row_multiple, ~target_bytes per block."""
    target_rows = max(row_multiple, target_bytes // max(1, W * itemsize))
    th = (target_rows // row_multiple) * row_multiple
    h_padded = ((H + row_multiple - 1) // row_multiple) * row_multiple
    return max(row_multiple, min(th, h_padded))


def mask_l2_loss(pred, gt, mask, *, block_target_bytes=2 << 20):
    """Pallas implementation of MaskL2Loss.forward.

    pred: (N, C, H, W); gt: (N, H, W); mask: (N, H, W).
    Returns (loss, dict(l1_loss=loss)) matching the PyTorch module
    (the 'l1_loss' key name mirrors the original module intentionally).
    """
    N, C, H, W = pred.shape
    p_isz = jnp.dtype(pred.dtype).itemsize
    g_isz = jnp.dtype(gt.dtype).itemsize
    m_isz = jnp.dtype(mask.dtype).itemsize

    row_mult = _row_multiple(pred.dtype, gt.dtype, mask.dtype)
    TH = _pick_row_chunk(H, W, row_mult, max(p_isz, g_isz, m_isz),
                         block_target_bytes)
    n_chunks = pl.cdiv(H, TH)
    padded = (n_chunks * TH) != H

    # Scoped-VMEM budget: 3 inputs x 2 pipeline buffers + tiny outputs + slack.
    in_block_bytes = TH * W * (p_isz + g_isz + m_isz)
    vmem_limit = int(min(max(32 << 20, 2 * in_block_bytes + (4 << 20)), 56 << 20))

    bytes_accessed = (
        N * H * W * (p_isz + g_isz + m_isz) + N * n_chunks * 8 * 128 * 4
    )
    cost = pl.CostEstimate(
        flops=5 * N * H * W, transcendentals=0, bytes_accessed=bytes_accessed
    )

    kernel = functools.partial(
        _mask_l2_kernel, th=TH, true_h=H, padded=padded
    )

    partials = pl.pallas_call(
        kernel,
        out_shape=jax.ShapeDtypeStruct((N, n_chunks, 8, 128), jnp.float32),
        grid_spec=pltpu.PrefetchScalarGridSpec(
            num_scalar_prefetch=0,
            grid=(N, n_chunks),
            in_specs=[
                # Channel-0 slice expressed in the BlockSpec: only pred[:, 0]
                # is ever DMA'd from HBM.  None dims are squeezed.
                pl.BlockSpec((None, None, TH, W), lambda n, c: (n, 0, c, 0)),
                pl.BlockSpec((None, TH, W), lambda n, c: (n, c, 0)),
                pl.BlockSpec((None, TH, W), lambda n, c: (n, c, 0)),
            ],
            out_specs=pl.BlockSpec(
                (None, None, 8, 128), lambda n, c: (n, c, 0, 0)
            ),
        ),
        compiler_params=pltpu.CompilerParams(
            dimension_semantics=("parallel", "parallel"),
            vmem_limit_bytes=vmem_limit,
        ),
        cost_estimate=cost,
    )(pred, gt, mask)

    num = partials[:, :, 0, 0].sum()
    mask_sum = partials[:, :, 4, 0].sum()
    # PyTorch returns mask_sum (== 0) when mask.sum() == 0; else the
    # normalized loss.  The data-dependent `.item()` early-return is expressed
    # branchlessly; safe denominator avoids a 0/0 NaN on the dead branch.
    safe_denom = jnp.where(mask_sum == 0, jnp.ones_like(mask_sum), mask_sum)
    loss = jnp.where(mask_sum == 0, jnp.zeros_like(mask_sum), num / safe_denom)
    return loss, dict(l1_loss=loss)


def _ref_loss(pred, gt, mask):
    p0 = pred[:, 0].astype(jnp.float32)
    g = gt.astype(jnp.float32)
    m = mask.astype(jnp.float32)
    msum = m.sum()
    return jnp.where(msum == 0, 0.0, ((p0 - g) ** 2 * m).sum() / msum)


if __name__ == "__main__":
    key = jax.random.PRNGKey(0)
    ks = jax.random.split(key, 9)

    # Test 1: small shapes matching the module's expected layout.
    N, C, H, W = 2, 4, 16, 16
    pred = jax.random.normal(ks[0], (N, C, H, W), dtype=jnp.float32)
    gt = jax.random.normal(ks[1], (N, H, W), dtype=jnp.float32)
    mask = (jax.random.uniform(ks[2], (N, H, W)) > 0.5).astype(jnp.float32)

    loss, aux = mask_l2_loss(pred, gt, mask)
    loss = jax.block_until_ready(loss)
    ref = _ref_loss(pred, gt, mask)
    assert jnp.allclose(loss, ref, rtol=1e-5, atol=1e-5), (loss, ref)
    assert jnp.allclose(aux["l1_loss"], ref, rtol=1e-5, atol=1e-5)

    # Test 2: multiple row chunks, lane-dense W=128 tiles, bf16 mask
    # (dtype-aware TH -> multiple of 16, upcast to f32 in-kernel).
    N2, C2, H2, W2 = 2, 4, 64, 128
    pred2 = jax.random.normal(ks[3], (N2, C2, H2, W2), dtype=jnp.float32)
    gt2 = jax.random.normal(ks[4], (N2, H2, W2), dtype=jnp.float32)
    mask2 = (jax.random.uniform(ks[5], (N2, H2, W2)) > 0.5).astype(jnp.bfloat16)

    loss2, _ = mask_l2_loss(pred2, gt2, mask2, block_target_bytes=16 * 128 * 4)
    loss2 = jax.block_until_ready(loss2)
    ref2 = _ref_loss(pred2, gt2, mask2)
    assert jnp.allclose(loss2, ref2, rtol=1e-5, atol=1e-5), (loss2, ref2)

    # Test 3: H not a multiple of TH (exercises the padded-row masking path).
    N3, C3, H3, W3 = 1, 3, 20, 16
    pred3 = jax.random.normal(ks[6], (N3, C3, H3, W3), dtype=jnp.float32)
    gt3 = jax.random.normal(ks[7], (N3, H3, W3), dtype=jnp.float32)
    mask3 = (jax.random.uniform(ks[8], (N3, H3, W3)) > 0.5).astype(jnp.float32)

    loss3, _ = mask_l2_loss(pred3, gt3, mask3, block_target_bytes=8 * 16 * 4)
    loss3 = jax.block_until_ready(loss3)
    ref3 = _ref_loss(pred3, gt3, mask3)
    assert jnp.allclose(loss3, ref3, rtol=1e-5, atol=1e-5), (loss3, ref3)

    # Test 4: zero-mask branch (PyTorch returns mask_sum == 0).
    loss0, _ = mask_l2_loss(pred, gt, jnp.zeros_like(mask))
    loss0 = jax.block_until_ready(loss0)
    assert float(loss0) == 0.0

    print("KERNEL_OK")
</pallas_src>

<mosaic_0001>
module attributes {stable_mosaic.version = 11 : i64} {
  func.func @_mask_l2_kernel(%arg0: i32, %arg1: i32, %arg2: memref<1x1x16x16xf32, #tpu.memory_space<vmem>>, %arg3: memref<1x16x16xf32, #tpu.memory_space<vmem>>, %arg4: memref<1x16x16xf32, #tpu.memory_space<vmem>>, %arg5: memref<1x1x8x128xf32, #tpu.memory_space<vmem>>) attributes {dimension_semantics = [#tpu.dimension_semantics<parallel>, #tpu.dimension_semantics<parallel>], iteration_bounds = array<i64: 2, 1>, scalar_prefetch = 0 : i64, scratch_operands = 0 : i64, tpu.core_type = #tpu.core_type<tc>, window_params = [{transform_indices = @transform_0, window_bounds = array<i64: 1, 1, 16, 16>}, {transform_indices = @transform_1, window_bounds = array<i64: 1, 16, 16>}, {transform_indices = @transform_2, window_bounds = array<i64: 1, 16, 16>}, {transform_indices = @transform_3, window_bounds = array<i64: 1, 1, 8, 128>}]} {
    %c0 = arith.constant 0 : index
    %c0_0 = arith.constant 0 : index
    %c0_1 = arith.constant 0 : index
    %c0_2 = arith.constant 0 : index
    %0 = vector.load %arg2[%c0, %c0_0, %c0_1, %c0_2] : memref<1x1x16x16xf32, #tpu.memory_space<vmem>>, vector<1x1x16x16xf32>
    %1 = vector.shape_cast %0 : vector<1x1x16x16xf32> to vector<16x16xf32>
    %c0_3 = arith.constant 0 : index
    %c0_4 = arith.constant 0 : index
    %c0_5 = arith.constant 0 : index
    %2 = vector.load %arg3[%c0_3, %c0_4, %c0_5] : memref<1x16x16xf32, #tpu.memory_space<vmem>>, vector<1x16x16xf32>
    %3 = vector.shape_cast %2 : vector<1x16x16xf32> to vector<16x16xf32>
    %c0_6 = arith.constant 0 : index
    %c0_7 = arith.constant 0 : index
    %c0_8 = arith.constant 0 : index
    %4 = vector.load %arg4[%c0_6, %c0_7, %c0_8] : memref<1x16x16xf32, #tpu.memory_space<vmem>>, vector<1x16x16xf32>
    %5 = vector.shape_cast %4 : vector<1x16x16xf32> to vector<16x16xf32>
    %6 = arith.subf %1, %3 : vector<16x16xf32>
    %7 = arith.mulf %6, %6 : vector<16x16xf32>
    %8 = arith.mulf %7, %5 : vector<16x16xf32>
    %9 = vector.shape_cast %8 : vector<16x16xf32> to vector<1x16x16xf32>
    %cst = arith.constant dense<0.000000e+00> : vector<1xf32>
    %10 = vector.multi_reduction <add>, %9, %cst [1, 2] : vector<1x16x16xf32> to vector<1xf32>
    %11 = vector.shape_cast %10 : vector<1xf32> to vector<1x1x1xf32>
    %12 = vector.extract %11[0, 0, 0] : f32 from vector<1x1x1xf32>
    %13 = vector.shape_cast %5 : vector<16x16xf32> to vector<1x16x16xf32>
    %cst_9 = arith.constant dense<0.000000e+00> : vector<1xf32>
    %14 = vector.multi_reduction <add>, %13, %cst_9 [1, 2] : vector<1x16x16xf32> to vector<1xf32>
    %15 = vector.shape_cast %14 : vector<1xf32> to vector<1x1x1xf32>
    %16 = vector.extract %15[0, 0, 0] : f32 from vector<1x1x1xf32>
    %17 = tpu.iota {dimensions = array<i32: 0>} : vector<8x128xi32>
    %c4_i32 = arith.constant 4 : i32
    %18 = vector.broadcast %c4_i32 : i32 to vector<8x128xi32>
    %19 = arith.cmpi slt, %17, %18 : vector<8x128xi32>
    %20 = vector.broadcast %12 : f32 to vector<8x128xf32>
    %21 = vector.broadcast %16 : f32 to vector<8x128xf32>
    %22 = arith.select %19, %20, %21 : vector<8x128xi1>, vector<8x128xf32>
    %c0_10 = arith.constant 0 : index
    %c0_11 = arith.constant 0 : index
    %c0_12 = arith.constant 0 : index
    %c0_13 = arith.constant 0 : index
    %23 = vector.load %arg5[%c0_10, %c0_11, %c0_12, %c0_13] : memref<1x1x8x128xf32, #tpu.memory_space<vmem>>, vector<1x1x8x128xf32>
    %24 = vector.shape_cast %23 : vector<1x1x8x128xf32> to vector<8x128xf32>
    %25 = vector.shape_cast %22 : vector<8x128xf32> to vector<1x1x8x128xf32>
    tpu.vector_store %arg5[%c0_10, %c0_11, %c0_12, %c0_13], %25 {strides = array<i32>} : memref<1x1x8x128xf32, #tpu.memory_space<vmem>>, vector<1x1x8x128xf32>,
    return
  }
  func.func @transform_0(%arg0: i32, %arg1: i32) -> (i32, i32, i32, i32) {
    %c0_i32 = arith.constant 0 : i32
    %c0_i32_0 = arith.constant 0 : i32
    %c0_i32_1 = arith.constant 0 : i32
    return %arg0, %c0_i32, %arg1, %c0_i32_0 : i32, i32, i32, i32
  }
  func.func @transform_1(%arg0: i32, %arg1: i32) -> (i32, i32, i32) {
    %c0_i32 = arith.constant 0 : i32
    %c0_i32_0 = arith.constant 0 : i32
    return %arg0, %arg1, %c0_i32 : i32, i32, i32
  }
  func.func @transform_2(%arg0: i32, %arg1: i32) -> (i32, i32, i32) {
    %c0_i32 = arith.constant 0 : i32
    %c0_i32_0 = arith.constant 0 : i32
    return %arg0, %arg1, %c0_i32 : i32, i32, i32
  }
  func.func @transform_3(%arg0: i32, %arg1: i32) -> (i32, i32, i32, i32) {
    %c0_i32 = arith.constant 0 : i32
    %c0_i32_0 = arith.constant 0 : i32
    %c0_i32_1 = arith.constant 0 : i32
    return %arg0, %arg1, %c0_i32, %c0_i32_0 : i32, i32, i32, i32
  }
}

</mosaic_0001>

<llo_original>
// kernel: tpu_custom_call.1
$region0: #{tpu_custom_call.1}
  #allocation0 [shape = 'u32[]', space=smem, size = 0x4, offset = 0x4, fixed_abs, tag = 'smem constant byte address 0x4 - core index']
  #allocation1 [shape = 'u32[144,128]{1,0:T(1,128)}', space=vmem, size = 0x12000, scoped, tag = 'internal scratch']
  %s0 = inlined_call_operand.hbm [shape: f32[2,4,16,16], index: 0, kind: input, shape index: {}]
  %s1 = inlined_call_operand.hbm [shape: f32[2,16,16], index: 1, kind: input, shape index: {}]
  %s2 = inlined_call_operand.hbm [shape: f32[2,16,16], index: 2, kind: input, shape index: {}]
  %s3 = inlined_call_operand.hbm [shape: f32[2,1,8,128], index: 3, kind: output, shape index: {}]
  %s4 = sld [smem:[#allocation0]]
  $region57: #{tpu_custom_call.1} parent=0
    _
  %s6 = ssub.s32 1, %s4
  %s7 = scalar_select 0, %s6, %s4
  $region1: #{tpu_custom_call.1} parent=0
    #allocation2 [shape = 'u8[16384]{0}', space=vmem, size = 0x4000, scoped, tag = 'input window, operand 0']
    #allocation3 [shape = 's32[2]{0}', space=sflag, size = 0x8, scoped, tag = 'scoped memory for tpu_custom_call.1']
    #allocation4 [shape = 's32[2]{0}', space=sflag, size = 0x8, scoped, tag = 'scoped memory for tpu_custom_call.1']
    #allocation5 [shape = 'u8[16384]{0}', space=vmem, size = 0x4000, scoped, tag = 'input window, operand 1']
    #allocation6 [shape = 's32[2]{0}', space=sflag, size = 0x8, scoped, tag = 'scoped memory for tpu_custom_call.1']
    #allocation7 [shape = 'u8[16384]{0}', space=vmem, size = 0x4000, scoped, tag = 'input window, operand 2']
    #allocation8 [shape = 'u8[8192]{0}', space=vmem, size = 0x2000, scoped, tag = 'output window, operand 0']
    %8 = vsyncpa [#allocation3], 0
    %s9 = scalar_lea.sflag [#allocation3], 1
    %10 = vsyncpa %s9, 0
    %11 = vsyncpa [#allocation6], 0
    %s12 = scalar_lea.sflag [#allocation6], 1
    %13 = vsyncpa %s12, 0
    %14 = vsyncpa [#allocation4], 0
    %s15 = scalar_lea.sflag [#allocation4], 1
    %16 = vsyncpa %s15, 0
    loop: start=0, step=1, limit=4
    $region2: #{tpu_custom_call.1} parent=1 // loop_pre_header
      _
    $region3: #{tpu_custom_call.1} parent=1 // loop_header
      %s18 = sphi 0, %s22
      %p19 = scmp.ge.s32.totalorder %s18, 4
      %s25 = sphi 0, %s37
      %s26 = sphi 0, %s33
      %s27 = sphi 0, %s25
      %s28 = sphi 0, %s26
      %s29 = sphi 0, %s27
      %s30 = sphi 0, %s28
      %s42 = sphi 0, %s44
      %s45 = sphi 0, %s42
      %s46 = sphi 0, %s45
      %s62 = sphi 0, %s46
      %s70 = sphi 0, %s72
      %s73 = sphi 0, %s70
      %s74 = sphi 0, %s73
      %s90 = sphi 0, %s74
      %s98 = sphi 0, %s100
      %s101 = sphi 0, %s98
      %s102 = sphi 0, %s101
      %s118 = sphi 0, %s102
      %s126 = sphi 0, %s128
      %s129 = sphi 0, %s126
      %s130 = sphi 0, %s129
      %s146 = sphi 0, %s130
    $region4: #{tpu_custom_call.1} parent=1 // loop_header_branch
      %21 = sbr.rel (%p19) target = $region8
    $region5: #{tpu_custom_call.1} parent=1 // loop_body
      %s23 = ssub.s32 %s18, 1
      %s24 = ssub.s32 %s18, 2
      %s31 = sadd.s32 1, %s26
      %p32 = scmp.ge.s32.totalorder %s31, 1
      %s33 = scalar_select %p32, 0, %s31
      %s34 = sadd.s32 1, %s25
      %s35 = scalar_select %p32, %s34, %s25
      %p36 = scmp.ge.s32.totalorder %s35, 2
      %s37 = scalar_select %p36, 0, %s35
      %s38 = ssub.s32 %s25, %s37
      %s39 = ssub.s32 %s26, %s33
      %s40 = sor.u32 %s38, %s39
      %p41 = scmp.eq.s32.totalorder %s40, 0
      %s43 = sadd.s32 %s42, 1
      %s44 = scalar_select %p41, %s42, %s43
      %p47 = pneg %p41
      %p48 = scmp.eq.s32.totalorder %s18, 1
      %p49 = por %p47, %p48
      %p50 = scmp.ne.s32.totalorder %s42, %s45
      %p51 = scmp.eq.s32.totalorder %s18, 0
      %p52 = por %p50, %p51
      %p53 = scmp.ne.s32.totalorder %s42, %s45
      %p54 = scmp.eq.s32.totalorder %s23, 1
      %p55 = por %p53, %p54
      %p56 = scmp.ne.s32.totalorder %s45, %s46
      %p57 = scmp.eq.s32.totalorder %s23, 0
      %p58 = por %p56, %p57
      %p59 = scmp.ne.s32.totalorder %s45, %s46
      %p60 = scmp.eq.s32.totalorder %s24, 1
      %p61 = por %p59, %p60
      %p63 = scmp.ne.s32.totalorder %s46, %s62
      %p64 = scmp.eq.s32.totalorder %s24, 0
      %p65 = por %p63, %p64
      %s66 = ssub.s32 %s25, %s37
      %s67 = ssub.s32 %s26, %s33
      %s68 = sor.u32 %s66, %s67
      %p69 = scmp.eq.s32.totalorder %s68, 0
      %s71 = sadd.s32 %s70, 1
      %s72 = scalar_select %p69, %s70, %s71
      %p75 = pneg %p69
      %p76 = scmp.eq.s32.totalorder %s18, 1
      %p77 = por %p75, %p76
      %p78 = scmp.ne.s32.totalorder %s70, %s73
      %p79 = scmp.eq.s32.totalorder %s18, 0
      %p80 = por %p78, %p79
      %p81 = scmp.ne.s32.totalorder %s70, %s73
      %p82 = scmp.eq.s32.totalorder %s23, 1
      %p83 = por %p81, %p82
      %p84 = scmp.ne.s32.totalorder %s73, %s74
      %p85 = scmp.eq.s32.totalorder %s23, 0
      %p86 = por %p84, %p85
      %p87 = scmp.ne.s32.totalorder %s73, %s74
      %p88 = scmp.eq.s32.totalorder %s24, 1
      %p89 = por %p87, %p88
      %p91 = scmp.ne.s32.totalorder %s74, %s90
      %p92 = scmp.eq.s32.totalorder %s24, 0
      %p93 = por %p91, %p92
      %s94 = ssub.s32 %s25, %s37
      %s95 = ssub.s32 %s26, %s33
      %s96 = sor.u32 %s94, %s95
      %p97 = scmp.eq.s32.totalorder %s96, 0
      %s99 = sadd.s32 %s98, 1
      %s100 = scalar_select %p97, %s98, %s99
      %p103 = pneg %p97
      %p104 = scmp.eq.s32.totalorder %s18, 1
      %p105 = por %p103, %p104
      %p106 = scmp.ne.s32.totalorder %s98, %s101
      %p107 = scmp.eq.s32.totalorder %s18, 0
      %p108 = por %p106, %p107
      %p109 = scmp.ne.s32.totalorder %s98, %s101
      %p110 = scmp.eq.s32.totalorder %s23, 1
      %p111 = por %p109, %p110
      %p112 = scmp.ne.s32.totalorder %s101, %s102
      %p113 = scmp.eq.s32.totalorder %s23, 0
      %p114 = por %p112, %p113
      %p115 = scmp.ne.s32.totalorder %s101, %s102
      %p116 = scmp.eq.s32.totalorder %s24, 1
      %p117 = por %p115, %p116
      %p119 = scmp.ne.s32.totalorder %s102, %s118
      %p120 = scmp.eq.s32.totalorder %s24, 0
      %p121 = por %p119, %p120
      %s122 = ssub.s32 %s25, %s37
      %s123 = ssub.s32 %s26, %s33
      %s124 = sor.u32 %s122, %s123
      %p125 = scmp.eq.s32.totalorder %s124, 0
      %s127 = sadd.s32 %s126, 1
      %s128 = scalar_select %p125, %s126, %s127
      %p131 = pneg %p125
      %p132 = scmp.eq.s32.totalorder %s18, 1
      %p133 = por %p131, %p132
      %p134 = scmp.ne.s32.totalorder %s126, %s129
      %p135 = scmp.eq.s32.totalorder %s18, 0
      %p136 = por %p134, %p135
      %p137 = scmp.ne.s32.totalorder %s126, %s129
      %p138 = scmp.eq.s32.totalorder %s23, 1
      %p139 = por %p137, %p138
      %p140 = scmp.ne.s32.totalorder %s129, %s130
      %p141 = scmp.eq.s32.totalorder %s23, 0
      %p142 = por %p140, %p141
      %p143 = scmp.ne.s32.totalorder %s129, %s130
      %p144 = scmp.eq.s32.totalorder %s24, 1
      %p145 = por %p143, %p144
      %p147 = scmp.ne.s32.totalorder %s130, %s146
      %p148 = scmp.eq.s32.totalorder %s24, 0
      %p149 = por %p147, %p148
      %p150 = scmp.le.s32.totalorder 1, %s18
      %p151 = scmp.lt.s32.totalorder %s18, 3
      %p152 = pnand %p150, %p151
      %p153 = pneg %p152
      // Predicated region
      $region9: #{tpu_custom_call.1} parent=5 // pred_check
        _
      $region10: #{tpu_custom_call.1} parent=5 // pred_check_branch
        %155 = sbr.rel (%p152) target = $region12
      $region11: #{tpu_custom_call.1} parent=5 // pred_region
        %s156 = ssub.s32 %s18, 1
      $region12: #{tpu_custom_call.1} parent=5 // pred_fallthru
        _
      %p157 = scmp.lt.s32.totalorder %s18, 2
      // Predicated region
      $region13: #{tpu_custom_call.1} parent=5 // pred_check
        %p158 = pneg %p157
      $region14: #{tpu_custom_call.1} parent=5 // pred_check_branch
        %160 = sbr.rel (%p158) target = $region16
      $region15: #{tpu_custom_call.1} parent=5 // pred_region
        // Predicated region
        $region17: #{tpu_custom_call.1} parent=15 // pred_check
          %p161 = pneg %p52
        $region18: #{tpu_custom_call.1} parent=15 // pred_check_branch
          %163 = sbr.rel (%p161) target = $region20
        $region19: #{tpu_custom_call.1} parent=15 // pred_region
          %s164 = sand.u32 %s42, 1
          %s165 = scalar_lea.sflag [#allocation3], %s164
          %s166 = sand.u32 %s42, 1
          %s167 = smul.addr %s166, 16
          %s168 = scalar_lea.vmem [#allocation2], %s167
          %s169 = smul.u32 2, %s26
          %s171 = ssub.s32 256, 256
          %172 = vsyncadd %s165, %s171
          %s173 = smul.addr %s25, 8
          %s174 = sadd.s32 %s169, %s173
          %s175 = smul.addr %s174, 128
          %s176 = scalar_lea.hbm %s0, %s175
          %s177 = sshll.u32 %s168, 4
          %s178 = int_to_ptr.vmem [resolvable:$true] %s177
          %183 = dma.hbm_to_vmem [thread:$0]  %s176, 256, %s178, %s165, 128, 128, 8
        $region20: #{tpu_custom_call.1} parent=15 // pred_fallthru
          _
        // Predicated region
        $region21: #{tpu_custom_call.1} parent=15 // pred_check
          %p184 = pneg %p80
        $region22: #{tpu_custom_call.1} parent=15 // pred_check_branch
          %186 = sbr.rel (%p184) target = $region24
        $region23: #{tpu_custom_call.1} parent=15 // pred_region
          %s187 = sand.u32 %s18, 1
          %s188 = scalar_lea.sflag [#allocation6], %s187
          %s189 = sand.u32 %s70, 1
          %s190 = smul.addr %s189, 16
          %s191 = scalar_lea.vmem [#allocation5], %s190
          %s192 = smul.u32 2, %s26
          %s194 = ssub.s32 256, 256
          %195 = vsyncadd %s188, %s194
          %s196 = smul.addr %s25, 2
          %s197 = sadd.s32 %s192, %s196
          %s198 = smul.addr %s197, 128
          %s199 = scalar_lea.hbm %s1, %s198
          %s200 = sshll.u32 %s191, 4
          %s201 = int_to_ptr.vmem [resolvable:$true] %s200
          %206 = dma.hbm_to_vmem [thread:$0]  %s199, 256, %s201, %s188, 128, 128, 8
        $region24: #{tpu_custom_call.1} parent=15 // pred_fallthru
          _
        // Predicated region
        $region25: #{tpu_custom_call.1} parent=15 // pred_check
          %p207 = pneg %p108
        $region26: #{tpu_custom_call.1} parent=15 // pred_check_branch
          %209 = sbr.rel (%p207) target = $region28
        $region27: #{tpu_custom_call.1} parent=15 // pred_region
          %s210 = sand.u32 %s18, 1
          %s211 = scalar_lea.sflag [#allocation6], %s210
          %s212 = sand.u32 %s98, 1
          %s213 = smul.addr %s212, 16
          %s214 = scalar_lea.vmem [#allocation7], %s213
          %s215 = smul.u32 2, %s26
          %s217 = ssub.s32 256, 256
          %218 = vsyncadd %s211, %s217
          %s219 = smul.addr %s25, 2
          %s220 = sadd.s32 %s215, %s219
          %s221 = smul.addr %s220, 128
          %s222 = scalar_lea.hbm %s2, %s221
          %s223 = sshll.u32 %s214, 4
          %s224 = int_to_ptr.vmem [resolvable:$true] %s223
          %229 = dma.hbm_to_vmem [thread:$0]  %s222, 256, %s224, %s211, 128, 128, 8
        $region28: #{tpu_custom_call.1} parent=15 // pred_fallthru
          _
      $region16: #{tpu_custom_call.1} parent=5 // pred_fallthru
        _
      %p230 = scmp.le.s32.totalorder 1, %s18
      %p231 = scmp.lt.s32.totalorder %s18, 3
      %p232 = pnand %p230, %p231
      %p233 = pneg %p232
      // Predicated region
      $region29: #{tpu_custom_call.1} parent=5 // pred_check
        _
      $region30: #{tpu_custom_call.1} parent=5 // pred_check_branch
        %235 = sbr.rel (%p232) target = $region32
      $region31: #{tpu_custom_call.1} parent=5 // pred_region
        %s236 = ssub.s32 %s18, 1
        %s237 = sand.u32 %s45, 1
        %s238 = scalar_lea.sflag [#allocation3], %s237
        %s239 = sand.u32 %s45, 1
        %s240 = smul.addr %s239, 16
        %s241 = scalar_lea.vmem [#allocation2], %s240
        // Predicated region
        $region33: #{tpu_custom_call.1} parent=31 // pred_check
          %p242 = pneg %p58
        $region34: #{tpu_custom_call.1} parent=31 // pred_check_branch
          %244 = sbr.rel (%p242) target = $region36
        $region35: #{tpu_custom_call.1} parent=31 // pred_region
          %245 = dma.done %s238, 256
        $region36: #{tpu_custom_call.1} parent=31 // pred_fallthru
          _
        %s246 = sand.u32 %s23, 1
        %s247 = scalar_lea.sflag [#allocation6], %s246
        %s248 = sand.u32 %s73, 1
        %s249 = smul.addr %s248, 16
        %s250 = scalar_lea.vmem [#allocation5], %s249
        // Predicated region
        $region37: #{tpu_custom_call.1} parent=31 // pred_check
          %p251 = pneg %p86
        $region38: #{tpu_custom_call.1} parent=31 // pred_check_branch
          %253 = sbr.rel (%p251) target = $region40
        $region39: #{tpu_custom_call.1} parent=31 // pred_region
          %254 = dma.done %s247, 256
        $region40: #{tpu_custom_call.1} parent=31 // pred_fallthru
          _
        %s255 = sand.u32 %s23, 1
        %s256 = scalar_lea.sflag [#allocation6], %s255
        %s257 = sand.u32 %s101, 1
        %s258 = smul.addr %s257, 16
        %s259 = scalar_lea.vmem [#allocation7], %s258
        // Predicated region
        $region41: #{tpu_custom_call.1} parent=31 // pred_check
          %p260 = pneg %p114
        $region42: #{tpu_custom_call.1} parent=31 // pred_check_branch
          %262 = sbr.rel (%p260) target = $region44
        $region43: #{tpu_custom_call.1} parent=31 // pred_region
          %263 = dma.done %s256, 256
        $region44: #{tpu_custom_call.1} parent=31 // pred_fallthru
          _
        %s264 = sand.u32 %s45, 1
        %s265 = scalar_lea.sflag [#allocation3], %s264
        %s266 = sand.u32 %s45, 1
        %s267 = smul.addr %s266, 16
        %s268 = scalar_lea.vmem [#allocation2], %s267
        %p269 = pneg %p58
        %p270 = pneg %p55
        %s271 = sand.u32 %s23, 1
        %s272 = scalar_lea.sflag [#allocation6], %s271
        %s273 = sand.u32 %s73, 1
        %s274 = smul.addr %s273, 16
        %s275 = scalar_lea.vmem [#allocation5], %s274
        %p276 = pneg %p86
        %p277 = pneg %p83
        %s278 = sand.u32 %s23, 1
        %s279 = scalar_lea.sflag [#allocation6], %s278
        %s280 = sand.u32 %s101, 1
        %s281 = smul.addr %s280, 16
        %s282 = scalar_lea.vmem [#allocation7], %s281
        %p283 = pneg %p114
        %p284 = pneg %p111
        %p285 = pneg %p142
        %p286 = pneg %p139
        %s287 = sand.u32 %s129, 1
        %s288 = scalar_lea.sflag [#allocation4], %s287
        %s289 = sand.u32 %s129, 1
        %s290 = smul.addr %s289, 8
        %s291 = scalar_lea.vmem [#allocation8], %s290
        %s292 = smul.u32 2, %s28
        %s293 = smul.u32 2, %s28
        %s294 = smul.u32 2, %s28
        %v295 = vld [vmem:[%s241] sm:$0xff]
        %v296 = vld [vmem:[%s241 + $0x8] sm:$0xff]
        %v297 = vld [vmem:[%s250] sm:$0xff]
        %v298 = vld [vmem:[%s250 + $0x8] sm:$0xff]
        %v299 = vld [vmem:[%s259] sm:$0xff]
        %v300 = vld [vmem:[%s259 + $0x8] sm:$0xff]
        %v301 = vsub.f32 %v295, %v297
        %v302 = vsub.f32 %v296, %v298
        %v303 = vmul.f32 %v301, %v301
        %v304 = vmul.f32 %v302, %v302
        %v305 = vmul.f32 %v303, %v299
        %v306 = vmul.f32 %v304, %v300
        %vm307 = vcmask 130048
        %v308 = vsel %vm307, %v305, 0.0
        %v309 = vsel %vm307, %v306, 0.0
        %v310 = vadd.f32 %v308, %v309
        %311 = vadd.xlane.f32.xlu0 %v310
        %v312 = vpop.xlane.xlu0 %311
        %v313 = vrot.slane %v312, 4
        %v314 = vadd.f32 %v312, %v313
        %v315 = vrot.slane %v314, 2
        %v316 = vadd.f32 %v314, %v315
        %v317 = vrot.slane %v316, 1
        %v318 = vadd.f32 %v316, %v317
        %s319 = vtos %v318
        %v320 = vsel %vm307, %v299, 0.0
        %v321 = vsel %vm307, %v300, 0.0
        %v322 = vadd.f32 %v320, %v321
        %323 = vadd.xlane.f32.xlu0 %v322
        %v324 = vpop.xlane.xlu0 %323
        %v325 = vrot.slane %v324, 4
        %v326 = vadd.f32 %v324, %v325
        %v327 = vrot.slane %v326, 2
        %v328 = vadd.f32 %v326, %v327
        %v329 = vrot.slane %v328, 1
        %v330 = vadd.f32 %v328, %v329
        %s331 = vtos %v330
        %v332 = vlaneseq
        %v333 = vshrl.u32 %v332, 7
        %vm334 = vcmp.lt.s32.totalorder %v333, 4
        %v335 = vstv %s319
        %v336 = vstv %s331
        %v337 = vsel %vm334, %v335, %v336
        %338 = vst [vmem:[%s291] sm:$0xff] %v337
        %s339 = sand.u32 %s129, 1
        %s340 = scalar_lea.sflag [#allocation4], %s339
        %s341 = sand.u32 %s129, 1
        %s342 = smul.addr %s341, 8
        %s343 = scalar_lea.vmem [#allocation8], %s342
        // Predicated region
        $region45: #{tpu_custom_call.1} parent=31 // pred_check
          %p344 = pneg %p139
        $region46: #{tpu_custom_call.1} parent=31 // pred_check_branch
          %346 = sbr.rel (%p344) target = $region48
        $region47: #{tpu_custom_call.1} parent=31 // pred_region
          %s348 = ssub.s32 128, 128
          %349 = vsyncadd %s340, %s348
          %s350 = sadd.s32 %s28, %s27
          %s351 = smul.addr %s350, 128
          %s352 = scalar_lea.hbm %s3, %s351
          %s354 = sshll.u32 %s343, 4
          %s355 = int_to_ptr.vmem [resolvable:$true] %s354
          %357 = dma.vmem_to_hbm [thread:$0]  %s355, 128, %s352, %s340
        $region48: #{tpu_custom_call.1} parent=31 // pred_fallthru
          _
      $region32: #{tpu_custom_call.1} parent=5 // pred_fallthru
        _
      %p358 = scmp.le.s32.totalorder 2, %s18
      // Predicated region
      $region49: #{tpu_custom_call.1} parent=5 // pred_check
        %p359 = pneg %p358
      $region50: #{tpu_custom_call.1} parent=5 // pred_check_branch
        %361 = sbr.rel (%p359) target = $region52
      $region51: #{tpu_custom_call.1} parent=5 // pred_region
        %s362 = ssub.s32 %s18, 2
        // Predicated region
        $region53: #{tpu_custom_call.1} parent=51 // pred_check
          %p363 = pneg %p145
        $region54: #{tpu_custom_call.1} parent=51 // pred_check_branch
          %365 = sbr.rel (%p363) target = $region56
        $region55: #{tpu_custom_call.1} parent=51 // pred_region
          %s366 = sand.u32 %s130, 1
          %s367 = scalar_lea.sflag [#allocation4], %s366
          %s368 = sand.u32 %s130, 1
          %s369 = smul.addr %s368, 8
          %s370 = scalar_lea.vmem [#allocation8], %s369
          %371 = dma.done %s367, 128
        $region56: #{tpu_custom_call.1} parent=51 // pred_fallthru
          _
      $region52: #{tpu_custom_call.1} parent=5 // pred_fallthru
        _
    $region6: #{tpu_custom_call.1} parent=1 // loop_footer
      %s22 = sadd.s32 1, %s18
    $region7: #{tpu_custom_call.1} parent=1 // loop_footer_branch
      %17 = sbr.rel target = $region3
    $region8: #{tpu_custom_call.1} parent=1 // loop_exit
      _
    %372 = vsyncpa [#allocation3], 1
    %s373 = scalar_lea.sflag [#allocation3], 1
    %374 = vsyncpa %s373, 1
    %375 = vsyncpa [#allocation6], 1
    %s376 = scalar_lea.sflag [#allocation6], 1
    %377 = vsyncpa %s376, 1
    %378 = vsyncpa [#allocation4], 1
    %s379 = scalar_lea.sflag [#allocation4], 1
    %380 = vsyncpa %s379, 1

</llo_original>
